<compile_context>
chip_gen: v7x
topology: tpu7x:2x2x1
jax: 0.10.0
libtpu: 0.0.40
codegen_flags: <defaults>
</compile_context>

<pallas_src>
import functools

import jax
import jax.numpy as jnp
from jax.experimental import pallas as pl
from jax.experimental.pallas import tpu as pltpu

_MIB = 1 << 20


def _round_up(x, m):
    return ((x + m - 1) // m) * m


def _cdiv(a, b):
    return (a + b - 1) // b


def _tpu_generation():
    try:
        kind = jax.devices()[0].device_kind.lower()
    except Exception:
        return "unknown"
    for tag, gen in (("v5 lite", "v5e"), ("v5lite", "v5e"), ("v5e", "v5e"),
                     ("v6", "v6e"), ("v7", "v7x"), ("v5", "v5p"), ("v4", "v4")):
        if tag in kind:
            return gen
    return "unknown"


# Usable-VMEM caps (conservative vs physical: 128 MiB on v4/v5/v6, 64 MiB on v7x).
_VMEM_CAP = {"v4": 100 * _MIB, "v5p": 100 * _MIB, "v5e": 100 * _MIB,
             "v6e": 100 * _MIB, "v7x": 56 * _MIB}
# Max batch-tile rows per generation.
_TM_CAP = {"v4": 512, "v5p": 512, "v5e": 512, "v6e": 512, "v7x": 256}


def _pad_lane_dim(d):
    # Lane-dense padding: multiples of 128 always; 256-multiples once the layer
    # is wide enough that full 256-wide MXU occupancy (v6e/v7x) is worth it.
    return _round_up(d, 256 if d >= 256 else 128)


def _mlp_kernel(num_layers, x_ref, *refs):
    """Fused MLP forward on one batch tile.

    refs = (w_0, ..., w_{L-1}, out).  Weights are pre-transposed / zero-padded:
    w_i is [in_i_pad, out_i_pad], so the contraction is `h @ w_i` with no
    in-kernel transpose.  All matmuls run on the MXU with f32 accumulation.
    """
    w_refs = refs[:num_layers]
    o_ref = refs[num_layers]

    # In-kernel f32 -> bf16 cast (VPU); avoids a wrapper-side HBM round-trip.
    h = x_ref[...].astype(jnp.bfloat16)
    for i in range(num_layers):
        acc = jnp.dot(h, w_refs[i][...], preferred_element_type=jnp.float32)
        if i < num_layers - 1:
            h = jnp.maximum(acc, 0.0).astype(jnp.bfloat16)   # f32 ReLU, bf16 feed
        else:
            h = acc                                          # final logits in f32
    o_ref[...] = h.astype(o_ref.dtype)


def mlp_forward(x, weights):
    """x: [B, ...] flattened row-major to [B, input_dim] (same as torch .view());
    weights: list of PyTorch-layout matrices [out_features, in_features]."""
    batch = x.shape[0]
    x2d = x.reshape(batch, -1)              # no dtype cast here (done in-kernel)
    input_dim = x2d.shape[1]
    num_layers = len(weights)
    num_classes = int(weights[-1].shape[0])

    # ---- one-time weight prep: transpose, bf16-cast, zero-pad to lane-dense dims.
    # Zero padding is exact: layers are bias-free and ReLU(0) == 0.
    dims = [input_dim]
    for i, w in enumerate(weights):
        out_i = int(w.shape[0])
        dims.append(_round_up(out_i, 128) if i == num_layers - 1
                    else _pad_lane_dim(out_i))
    wt = []
    for i, w in enumerate(weights):
        w_t = jnp.asarray(w, dtype=jnp.bfloat16).T           # [in_i, out_i]
        pad_in = dims[i] - w_t.shape[0]
        pad_out = dims[i + 1] - w_t.shape[1]
        if pad_in or pad_out:
            w_t = jnp.pad(w_t, ((0, pad_in), (0, pad_out)))
        wt.append(w_t)
    n_pad = dims[-1]

    # ---- per-generation batch tile + explicit VMEM budget.
    gen = _tpu_generation()
    vmem_cap = _VMEM_CAP.get(gen, 56 * _MIB)
    tm_cap = _TM_CAP.get(gen, 256)

    x_item = jnp.dtype(x2d.dtype).itemsize
    weight_bytes = sum(int(w.size) for w in wt) * 2           # bf16, single buffer
    per_row = (input_dim * x_item * 2                         # 2x-buffered input tile
               + n_pad * 4 * 2                                # 2x-buffered f32 output
               + max(dims[1:]) * 4 * 2)                       # f32 intermediates/slack
    avail = vmem_cap - 4 * _MIB - weight_bytes
    rows_budget = max(16, avail // per_row) if avail > 0 else 16

    if batch < 16:
        tm = batch                          # one full block (block dim == array dim)
    else:
        tm = min(tm_cap, (batch // 16) * 16)        # multiple of 16, <= batch
        if gen == "v7x":
            # >=2 grid steps so both v7x TensorCores get work.
            tm = min(tm, _round_up(_cdiv(batch, 2), 16))
        tm = max(16, min(tm, (rows_budget // 16) * 16))
    grid = (_cdiv(batch, tm),)

    vmem_limit = int(min(vmem_cap,
                         max(32 * _MIB,
                             2 * weight_bytes + tm * per_row + 4 * _MIB)))
    # TODO(synk): for very large widths where weights can no longer sit
    # VMEM-resident (first on v7x's 64 MiB), stream weight tiles over an extra
    # grid axis / pltpu.emit_pipeline instead of the all-resident strategy.

    flops = 2 * batch * sum(dims[i] * dims[i + 1] for i in range(num_layers))
    bytes_accessed = int(x2d.size) * x_item + weight_bytes + batch * n_pad * 4

    kernel = functools.partial(_mlp_kernel, num_layers)
    out_shape = jax.ShapeDtypeStruct((batch, n_pad), jnp.float32)
    compiler_params = pltpu.CompilerParams(
        dimension_semantics=("parallel",),
        vmem_limit_bytes=vmem_limit,
    )
    cost = pl.CostEstimate(flops=flops, transcendentals=0,
                           bytes_accessed=bytes_accessed)

    def _run(single_buffer_weights):
        in_specs = [pl.BlockSpec((tm, input_dim), lambda i: (i, 0))]
        for w_t in wt:
            if single_buffer_weights:
                # Constant block index -> weights stay VMEM-resident; one buffer
                # is enough (halves weight VMEM vs. default double buffering).
                in_specs.append(pl.BlockSpec(w_t.shape, lambda i: (0, 0),
                                             pipeline_mode=pl.Buffered(1)))
            else:
                in_specs.append(pl.BlockSpec(w_t.shape, lambda i: (0, 0)))
        out_spec = pl.BlockSpec((tm, n_pad), lambda i: (i, 0))
        return pl.pallas_call(
            kernel,
            out_shape=out_shape,
            grid=grid,
            in_specs=in_specs,
            out_specs=out_spec,
            compiler_params=compiler_params,
            cost_estimate=cost,
        )(x2d, *wt)

    if hasattr(pl, "Buffered"):
        try:
            out = _run(True)
        except Exception:
            out = _run(False)     # older/stricter Mosaic: default double buffering
    else:
        out = _run(False)

    return out[:, :num_classes]


def init_mlp_params(key, input_dim, width, depth, num_classes):
    """Deterministic init mimicking PyTorch Linear: U(-1/sqrt(fan_in), 1/sqrt(fan_in))."""
    assert depth >= 2
    dims = [input_dim] + [width] * (depth - 1) + [num_classes]
    weights = []
    for i in range(depth):
        fan_in, fan_out = dims[i], dims[i + 1]
        key, sub = jax.random.split(key)
        bound = 1.0 / jnp.sqrt(jnp.float32(fan_in))
        w = jax.random.uniform(
            sub, (fan_out, fan_in), dtype=jnp.float32, minval=-bound, maxval=bound
        )
        weights.append(w)
    return weights


def mlp_reference(x, weights, compute_dtype=jnp.bfloat16):
    """Pure-JAX reference matching the kernel's numerics (bf16 operands, f32 acc)."""
    h = x.reshape(x.shape[0], -1).astype(jnp.float32)
    for i, w in enumerate(weights):
        hq = h.astype(compute_dtype).astype(jnp.float32)
        wq = jnp.asarray(w, compute_dtype).astype(jnp.float32)
        h = hq @ wq.T
        if i < len(weights) - 1:
            h = jnp.maximum(h, 0.0)
    return h


def mlp_reference_f32(x, weights):
    """Pure f32 reference of the PyTorch forward (loose sanity check)."""
    h = x.reshape(x.shape[0], -1)
    for i, w in enumerate(weights):
        h = h @ w.T
        if i < len(weights) - 1:
            h = jnp.maximum(h, 0.0)
    return h


if __name__ == "__main__":
    # Small shapes consistent with the module: input_dim = 8*8, width = 32,
    # depth = 3 (input layer + 1 hidden + output), num_classes = 10, batch = 2.
    batch, c, h, w = 2, 1, 8, 8
    input_dim = c * h * w
    width = 32
    depth = 3
    num_classes = 10

    key = jax.random.PRNGKey(0)
    key, xkey = jax.random.split(key)
    x = jax.random.normal(xkey, (batch, c, h, w), dtype=jnp.float32)

    weights = init_mlp_params(key, input_dim, width, depth, num_classes)

    out = mlp_forward(x, weights)
    out = jax.block_until_ready(out)

    assert out.shape == (batch, num_classes)
    # Tight check vs a reference that mirrors the kernel's bf16/f32 numerics.
    ref_q = mlp_reference(x, weights)
    assert jnp.allclose(out, ref_q, atol=1e-3, rtol=1e-3), "mismatch vs bf16-matched reference"
    # Loose sanity check vs the pure-f32 PyTorch-equivalent forward.
    ref_f32 = mlp_reference_f32(x, weights)
    assert jnp.allclose(out, ref_f32, atol=3e-2, rtol=3e-2), "mismatch vs f32 reference"

    print("KERNEL_OK")
</pallas_src>

<mosaic_0001>
module attributes {stable_mosaic.version = 11 : i64} {
  func.func @_mlp_kernel(%arg0: i32, %arg1: memref<2x64xf32, #tpu.memory_space<vmem>>, %arg2: memref<64x128xbf16, #tpu.memory_space<vmem>>, %arg3: memref<128x128xbf16, #tpu.memory_space<vmem>>, %arg4: memref<128x128xbf16, #tpu.memory_space<vmem>>, %arg5: memref<2x128xf32, #tpu.memory_space<vmem>>) attributes {dimension_semantics = [#tpu.dimension_semantics<parallel>], iteration_bounds = array<i64: 1>, scalar_prefetch = 0 : i64, scratch_operands = 0 : i64, tpu.core_type = #tpu.core_type<tc>, window_params = [{transform_indices = @transform_0, window_bounds = array<i64: 2, 64>}, {pipeline_mode = #tpu.pipeline_mode<synchronous>, transform_indices = @transform_1, window_bounds = array<i64: 64, 128>}, {pipeline_mode = #tpu.pipeline_mode<synchronous>, transform_indices = @transform_2, window_bounds = array<i64: 128, 128>}, {pipeline_mode = #tpu.pipeline_mode<synchronous>, transform_indices = @transform_3, window_bounds = array<i64: 128, 128>}, {transform_indices = @transform_4, window_bounds = array<i64: 2, 128>}]} {
    %c0 = arith.constant 0 : index
    %c0_0 = arith.constant 0 : index
    %0 = vector.load %arg1[%c0, %c0_0] : memref<2x64xf32, #tpu.memory_space<vmem>>, vector<2x64xf32>
    %1 = arith.truncf %0 : vector<2x64xf32> to vector<2x64xbf16>
    %c0_1 = arith.constant 0 : index
    %c0_2 = arith.constant 0 : index
    %2 = vector.load %arg2[%c0_1, %c0_2] : memref<64x128xbf16, #tpu.memory_space<vmem>>, vector<64x128xbf16>
    %cst = arith.constant dense<0.000000e+00> : vector<2x128xf32>
    %3 = tpu.matmul %1, %2, %cst {dimension_numbers = #tpu.dot_dimension_numbers<[1], [0], [0], [1], [0, 0, 1, 1], [], []>} : vector<2x64xbf16>, vector<64x128xbf16>, vector<2x128xf32> -> vector<2x128xf32>
    %cst_3 = arith.constant 0.000000e+00 : f32
    %4 = vector.broadcast %cst_3 : f32 to vector<2x128xf32>
    %5 = arith.maximumf %3, %4 : vector<2x128xf32>
    %6 = arith.truncf %5 : vector<2x128xf32> to vector<2x128xbf16>
    %c0_4 = arith.constant 0 : index
    %c0_5 = arith.constant 0 : index
    %7 = vector.load %arg3[%c0_4, %c0_5] : memref<128x128xbf16, #tpu.memory_space<vmem>>, vector<128x128xbf16>
    %cst_6 = arith.constant dense<0.000000e+00> : vector<2x128xf32>
    %8 = tpu.matmul %6, %7, %cst_6 {dimension_numbers = #tpu.dot_dimension_numbers<[1], [0], [0], [1], [0, 0, 1, 1], [], []>} : vector<2x128xbf16>, vector<128x128xbf16>, vector<2x128xf32> -> vector<2x128xf32>
    %cst_7 = arith.constant 0.000000e+00 : f32
    %9 = vector.broadcast %cst_7 : f32 to vector<2x128xf32>
    %10 = arith.maximumf %8, %9 : vector<2x128xf32>
    %11 = arith.truncf %10 : vector<2x128xf32> to vector<2x128xbf16>
    %c0_8 = arith.constant 0 : index
    %c0_9 = arith.constant 0 : index
    %12 = vector.load %arg4[%c0_8, %c0_9] : memref<128x128xbf16, #tpu.memory_space<vmem>>, vector<128x128xbf16>
    %cst_10 = arith.constant dense<0.000000e+00> : vector<2x128xf32>
    %13 = tpu.matmul %11, %12, %cst_10 {dimension_numbers = #tpu.dot_dimension_numbers<[1], [0], [0], [1], [0, 0, 1, 1], [], []>} : vector<2x128xbf16>, vector<128x128xbf16>, vector<2x128xf32> -> vector<2x128xf32>
    %c0_11 = arith.constant 0 : index
    %c0_12 = arith.constant 0 : index
    %14 = vector.load %arg5[%c0_11, %c0_12] : memref<2x128xf32, #tpu.memory_space<vmem>>, vector<2x128xf32>
    tpu.vector_store %arg5[%c0_11, %c0_12], %13 {strides = array<i32>} : memref<2x128xf32, #tpu.memory_space<vmem>>, vector<2x128xf32>,
    return
  }
  func.func @transform_0(%arg0: i32) -> (i32, i32) {
    %c0_i32 = arith.constant 0 : i32
    %c0_i32_0 = arith.constant 0 : i32
    return %arg0, %c0_i32 : i32, i32
  }
  func.func @transform_1(%arg0: i32) -> (i32, i32) {
    %c0_i32 = arith.constant 0 : i32
    %c0_i32_0 = arith.constant 0 : i32
    %c0_i32_1 = arith.constant 0 : i32
    return %c0_i32, %c0_i32_0 : i32, i32
  }
  func.func @transform_2(%arg0: i32) -> (i32, i32) {
    %c0_i32 = arith.constant 0 : i32
    %c0_i32_0 = arith.constant 0 : i32
    %c0_i32_1 = arith.constant 0 : i32
    return %c0_i32, %c0_i32_0 : i32, i32
  }
  func.func @transform_3(%arg0: i32) -> (i32, i32) {
    %c0_i32 = arith.constant 0 : i32
    %c0_i32_0 = arith.constant 0 : i32
    %c0_i32_1 = arith.constant 0 : i32
    return %c0_i32, %c0_i32_0 : i32, i32
  }
  func.func @transform_4(%arg0: i32) -> (i32, i32) {
    %c0_i32 = arith.constant 0 : i32
    %c0_i32_0 = arith.constant 0 : i32
    return %arg0, %c0_i32 : i32, i32
  }
}

module attributes {stable_mosaic.version = 11 : i64} {
  func.func @_mlp_kernel(%arg0: i32, %arg1: memref<2x64xf32, #tpu.memory_space<vmem>>, %arg2: memref<64x128xbf16, #tpu.memory_space<vmem>>, %arg3: memref<128x128xbf16, #tpu.memory_space<vmem>>, %arg4: memref<128x128xbf16, #tpu.memory_space<vmem>>, %arg5: memref<2x128xf32, #tpu.memory_space<vmem>>) attributes {dimension_semantics = [#tpu.dimension_semantics<parallel>], iteration_bounds = array<i64: 1>, scalar_prefetch = 0 : i64, scratch_operands = 0 : i64, tpu.core_type = #tpu.core_type<tc>, window_params = [{transform_indices = @transform_0, window_bounds = array<i64: 2, 64>}, {pipeline_mode = #tpu.pipeline_mode<synchronous>, transform_indices = @transform_1, window_bounds = array<i64: 64, 128>}, {pipeline_mode = #tpu.pipeline_mode<synchronous>, transform_indices = @transform_2, window_bounds = array<i64: 128, 128>}, {pipeline_mode = #tpu.pipeline_mode<synchronous>, transform_indices = @transform_3, window_bounds = array<i64: 128, 128>}, {transform_indices = @transform_4, window_bounds = array<i64: 2, 128>}]} {
    %c0 = arith.constant 0 : index
    %c0_0 = arith.constant 0 : index
    %0 = vector.load %arg1[%c0, %c0_0] : memref<2x64xf32, #tpu.memory_space<vmem>>, vector<2x64xf32>
    %1 = arith.truncf %0 : vector<2x64xf32> to vector<2x64xbf16>
    %c0_1 = arith.constant 0 : index
    %c0_2 = arith.constant 0 : index
    %2 = vector.load %arg2[%c0_1, %c0_2] : memref<64x128xbf16, #tpu.memory_space<vmem>>, vector<64x128xbf16>
    %cst = arith.constant dense<0.000000e+00> : vector<2x128xf32>
    %3 = tpu.matmul %1, %2, %cst {dimension_numbers = #tpu.dot_dimension_numbers<[1], [0], [0], [1], [0, 0, 1, 1], [], []>} : vector<2x64xbf16>, vector<64x128xbf16>, vector<2x128xf32> -> vector<2x128xf32>
    %cst_3 = arith.constant 0.000000e+00 : f32
    %4 = vector.broadcast %cst_3 : f32 to vector<2x128xf32>
    %5 = arith.maximumf %3, %4 : vector<2x128xf32>
    %6 = arith.truncf %5 : vector<2x128xf32> to vector<2x128xbf16>
    %c0_4 = arith.constant 0 : index
    %c0_5 = arith.constant 0 : index
    %7 = vector.load %arg3[%c0_4, %c0_5] : memref<128x128xbf16, #tpu.memory_space<vmem>>, vector<128x128xbf16>
    %cst_6 = arith.constant dense<0.000000e+00> : vector<2x128xf32>
    %8 = tpu.matmul %6, %7, %cst_6 {dimension_numbers = #tpu.dot_dimension_numbers<[1], [0], [0], [1], [0, 0, 1, 1], [], []>} : vector<2x128xbf16>, vector<128x128xbf16>, vector<2x128xf32> -> vector<2x128xf32>
    %cst_7 = arith.constant 0.000000e+00 : f32
    %9 = vector.broadcast %cst_7 : f32 to vector<2x128xf32>
    %10 = arith.maximumf %8, %9 : vector<2x128xf32>
    %11 = arith.truncf %10 : vector<2x128xf32> to vector<2x128xbf16>
    %c0_8 = arith.constant 0 : index
    %c0_9 = arith.constant 0 : index
    %12 = vector.load %arg4[%c0_8, %c0_9] : memref<128x128xbf16, #tpu.memory_space<vmem>>, vector<128x128xbf16>
    %cst_10 = arith.constant dense<0.000000e+00> : vector<2x128xf32>
    %13 = tpu.matmul %11, %12, %cst_10 {dimension_numbers = #tpu.dot_dimension_numbers<[1], [0], [0], [1], [0, 0, 1, 1], [], []>} : vector<2x128xbf16>, vector<128x128xbf16>, vector<2x128xf32> -> vector<2x128xf32>
    %c0_11 = arith.constant 0 : index
    %c0_12 = arith.constant 0 : index
    %14 = vector.load %arg5[%c0_11, %c0_12] : memref<2x128xf32, #tpu.memory_space<vmem>>, vector<2x128xf32>
    tpu.vector_store %arg5[%c0_11, %c0_12], %13 {strides = array<i32>} : memref<2x128xf32, #tpu.memory_space<vmem>>, vector<2x128xf32>,
    return
  }
  func.func @transform_0(%arg0: i32) -> (i32, i32) {
    %c0_i32 = arith.constant 0 : i32
    %c0_i32_0 = arith.constant 0 : i32
    return %arg0, %c0_i32 : i32, i32
  }
  func.func @transform_1(%arg0: i32) -> (i32, i32) {
    %c0_i32 = arith.constant 0 : i32
    %c0_i32_0 = arith.constant 0 : i32
    %c0_i32_1 = arith.constant 0 : i32
    return %c0_i32, %c0_i32_0 : i32, i32
  }
  func.func @transform_2(%arg0: i32) -> (i32, i32) {
    %c0_i32 = arith.constant 0 : i32
    %c0_i32_0 = arith.constant 0 : i32
    %c0_i32_1 = arith.constant 0 : i32
    return %c0_i32, %c0_i32_0 : i32, i32
  }
  func.func @transform_3(%arg0: i32) -> (i32, i32) {
    %c0_i32 = arith.constant 0 : i32
    %c0_i32_0 = arith.constant 0 : i32
    %c0_i32_1 = arith.constant 0 : i32
    return %c0_i32, %c0_i32_0 : i32, i32
  }
  func.func @transform_4(%arg0: i32) -> (i32, i32) {
    %c0_i32 = arith.constant 0 : i32
    %c0_i32_0 = arith.constant 0 : i32
    return %arg0, %c0_i32 : i32, i32
  }
}

</mosaic_0001>

<llo_original>
// kernel: tpu_custom_call.1
$region0: #{tpu_custom_call.1}
  #allocation0 [shape = 'u32[]', space=smem, size = 0x4, offset = 0x4, fixed_abs, tag = 'smem constant byte address 0x4 - core index']
  #allocation1 [shape = 'u32[144,128]{1,0:T(1,128)}', space=vmem, size = 0x12000, scoped, tag = 'internal scratch']
  %s0 = inlined_call_operand.hbm [shape: f32[2,64], index: 0, kind: input, shape index: {}]
  %s1 = inlined_call_operand.hbm [shape: bf16[64,128], index: 1, kind: input, shape index: {}]
  %s2 = inlined_call_operand.hbm [shape: bf16[128,128], index: 2, kind: input, shape index: {}]
  %s3 = inlined_call_operand.hbm [shape: bf16[128,128], index: 3, kind: input, shape index: {}]
  %s4 = inlined_call_operand.hbm [shape: f32[2,128], index: 4, kind: output, shape index: {}]
  %s5 = sld [smem:[#allocation0]]
  $region42: #{tpu_custom_call.1} parent=0
    _
  %s7 = ssub.s32 1, %s5
  %s8 = scalar_select 0, %s7, %s5
  $region1: #{tpu_custom_call.1} parent=0
    #allocation2 [shape = 'u8[1024]{0}', space=vmem, size = 0x400, scoped, tag = 'input window, operand 0, single buffered']
    #allocation3 [shape = 's32[1]{0}', space=sflag, size = 0x4, scoped, tag = 'scoped memory for tpu_custom_call.1']
    #allocation4 [shape = 's32[1]{0}', space=sflag, size = 0x4, scoped, tag = 'scoped memory for tpu_custom_call.1']
    #allocation5 [shape = 'u8[16384]{0}', space=vmem, size = 0x4000, scoped, tag = 'input window, operand 1, single buffered']
    #allocation6 [shape = 's32[1]{0}', space=sflag, size = 0x4, scoped, tag = 'scoped memory for tpu_custom_call.1']
    #allocation7 [shape = 'u8[32768]{0}', space=vmem, size = 0x8000, scoped, tag = 'input window, operand 2, single buffered']
    #allocation8 [shape = 'u8[32768]{0}', space=vmem, size = 0x8000, scoped, tag = 'input window, operand 3, single buffered']
    #allocation9 [shape = 's32[1]{0}', space=sflag, size = 0x4, scoped, tag = 'scoped memory for tpu_custom_call.1']
    #allocation10 [shape = 'u8[1024]{0}', space=vmem, size = 0x400, scoped, tag = 'output window, operand 0, single buffered']
    %9 = vsyncpa [#allocation3], 0
    %10 = vsyncpa [#allocation6], 0
    %11 = vsyncpa [#allocation9], 0
    %12 = vsyncpa [#allocation4], 0
    // Predicated region
    $region2: #{tpu_custom_call.1} parent=1 // pred_check
      _
    $region3: #{tpu_custom_call.1} parent=1 // pred_check_branch
      %14 = sbr.rel (0) target = $region5
    $region4: #{tpu_custom_call.1} parent=1 // pred_region
      %s16 = ssub.s32 32, 32
      %17 = vsyncadd [#allocation3], %s16
      %s19 = sshll.u32 [#allocation2], 4
      %s20 = int_to_ptr.vmem [resolvable:$true] %s19
      %22 = dma.hbm_to_vmem [thread:$0]  %s0, 32, %s20, [#allocation3]
    $region5: #{tpu_custom_call.1} parent=1 // pred_fallthru
      _
    // Predicated region
    $region6: #{tpu_custom_call.1} parent=1 // pred_check
      _
    $region7: #{tpu_custom_call.1} parent=1 // pred_check_branch
      %24 = sbr.rel (0) target = $region9
    $region8: #{tpu_custom_call.1} parent=1 // pred_region
      %s26 = ssub.s32 512, 512
      %27 = vsyncadd [#allocation6], %s26
      %s28 = sshll.u32 [#allocation5], 4
      %s29 = int_to_ptr.vmem [resolvable:$true] %s28
      %34 = dma.hbm_to_vmem [thread:$0]  %s1, 512, %s29, [#allocation6], 64, 64, 4
    $region9: #{tpu_custom_call.1} parent=1 // pred_fallthru
      _
    // Predicated region
    $region10: #{tpu_custom_call.1} parent=1 // pred_check
      _
    $region11: #{tpu_custom_call.1} parent=1 // pred_check_branch
      %36 = sbr.rel (0) target = $region13
    $region12: #{tpu_custom_call.1} parent=1 // pred_region
      %s38 = ssub.s32 1024, 1024
      %39 = vsyncadd [#allocation6], %s38
      %s40 = sshll.u32 [#allocation7], 4
      %s41 = int_to_ptr.vmem [resolvable:$true] %s40
      %46 = dma.hbm_to_vmem [thread:$0]  %s2, 1024, %s41, [#allocation6], 64, 64, 4
    $region13: #{tpu_custom_call.1} parent=1 // pred_fallthru
      _
    // Predicated region
    $region14: #{tpu_custom_call.1} parent=1 // pred_check
      _
    $region15: #{tpu_custom_call.1} parent=1 // pred_check_branch
      %48 = sbr.rel (0) target = $region17
    $region16: #{tpu_custom_call.1} parent=1 // pred_region
      %s50 = ssub.s32 1024, 1024
      %51 = vsyncadd [#allocation9], %s50
      %s52 = sshll.u32 [#allocation8], 4
      %s53 = int_to_ptr.vmem [resolvable:$true] %s52
      %58 = dma.hbm_to_vmem [thread:$0]  %s3, 1024, %s53, [#allocation9], 64, 64, 4
    $region17: #{tpu_custom_call.1} parent=1 // pred_fallthru
      _
    // Predicated region
    $region18: #{tpu_custom_call.1} parent=1 // pred_check
      _
    $region19: #{tpu_custom_call.1} parent=1 // pred_check_branch
      %60 = sbr.rel (0) target = $region21
    $region20: #{tpu_custom_call.1} parent=1 // pred_region
      %61 = dma.done [#allocation3], 32
    $region21: #{tpu_custom_call.1} parent=1 // pred_fallthru
      _
    // Predicated region
    $region22: #{tpu_custom_call.1} parent=1 // pred_check
      _
    $region23: #{tpu_custom_call.1} parent=1 // pred_check_branch
      %63 = sbr.rel (0) target = $region25
    $region24: #{tpu_custom_call.1} parent=1 // pred_region
      %64 = dma.done [#allocation6], 512
    $region25: #{tpu_custom_call.1} parent=1 // pred_fallthru
      _
    // Predicated region
    $region26: #{tpu_custom_call.1} parent=1 // pred_check
      _
    $region27: #{tpu_custom_call.1} parent=1 // pred_check_branch
      %66 = sbr.rel (0) target = $region29
    $region28: #{tpu_custom_call.1} parent=1 // pred_region
      %67 = dma.done [#allocation6], 1024
    $region29: #{tpu_custom_call.1} parent=1 // pred_fallthru
      _
    // Predicated region
    $region30: #{tpu_custom_call.1} parent=1 // pred_check
      _
    $region31: #{tpu_custom_call.1} parent=1 // pred_check_branch
      %69 = sbr.rel (0) target = $region33
    $region32: #{tpu_custom_call.1} parent=1 // pred_region
      %70 = dma.done [#allocation9], 1024
    $region33: #{tpu_custom_call.1} parent=1 // pred_fallthru
      _
    %v72 = vld [vmem:[#allocation2] sm:$0x3]
    %v73 = vpack.c.bf16 %v72, %v72
    %v74 = vld [vmem:[#allocation5] sm:$0xf]
    %v75 = vld [vmem:[#allocation5 + $0x4] sm:$0xf]
    %v76 = vld [vmem:[#allocation5 + $0x8] sm:$0xf]
    %v77 = vld [vmem:[#allocation5 + $0xc] sm:$0xf]
    %v78 = vld [vmem:[#allocation5 + $0x10] sm:$0xf]
    %v79 = vld [vmem:[#allocation5 + $0x14] sm:$0xf]
    %v80 = vld [vmem:[#allocation5 + $0x18] sm:$0xf]
    %v81 = vld [vmem:[#allocation5 + $0x1c] sm:$0xf]
    %v90 = vunpack.c.l.b16 %v74
    %v91 = vunpack.c.l.b16 %v75
    %v92 = vunpack.c.l.b16 %v76
    %v93 = vunpack.c.l.b16 %v77
    %v94 = vunpack.c.l.b16 %v78
    %v95 = vunpack.c.l.b16 %v79
    %v96 = vunpack.c.l.b16 %v80
    %v97 = vunpack.c.l.b16 %v81
    %v98 = vpack.c.b16 %v91, %v90
    %v99 = vpack.c.b16 %v93, %v92
    %v100 = vpack.c.b16 %v95, %v94
    %v101 = vpack.c.b16 %v97, %v96
    %vm106 = vcmask 523264
    %v108 = vsel %vm106, %v73, 0
    %110 = vmatprep.subr.bf16.mxu0 0
    %111 = vmatpush1.bf16.msra.mxu0 %v98
    %112 = vmatprep.subr.bf16.mxu0 0
    %113 = vmatpush1.bf16.msra.mxu0 %v99
    %114 = vmatprep.subr.bf16.mxu0 0
    %115 = vmatpush1.bf16.msra.mxu0 %v100
    %116 = vmatprep.subr.bf16.mxu0 0
    %117 = vmatpush1.bf16.msra.mxu0 %v101
    %118 = vmatprep.subr.bf16.mxu0 0
    %119 = vmatpush1.bf16.msra.mxu0 0
    %120 = vmatprep.subr.bf16.mxu0 0
    %121 = vmatpush1.bf16.msra.mxu0 0
    %122 = vmatprep.subr.bf16.mxu0 0
    %123 = vmatpush1.bf16.msra.mxu0 0
    %124 = vmatprep.subr.bf16.mxu0 0
    %125 = vmatpush1.bf16.msra.mxu0 0
    %126 = vmatprep.subr.bf16.mxu0 0
    %127 = vmatpush1.bf16.msra.mxu0 0
    %128 = vmatprep.subr.bf16.mxu0 0
    %129 = vmatpush1.bf16.msra.mxu0 0
    %130 = vmatprep.subr.bf16.mxu0 0
    %131 = vmatpush1.bf16.msra.mxu0 0
    %132 = vmatprep.subr.bf16.mxu0 0
    %133 = vmatpush1.bf16.msra.mxu0 0
    %134 = vmatprep.subr.bf16.mxu0 0
    %135 = vmatpush1.bf16.msra.mxu0 0
    %136 = vmatprep.subr.bf16.mxu0 0
    %137 = vmatpush1.bf16.msra.mxu0 0
    %138 = vmatprep.subr.bf16.mxu0 0
    %139 = vmatpush1.bf16.msra.mxu0 0
    %140 = vmatprep.subr.bf16.mxu0 0
    %141 = vmatpush1.bf16.msra.mxu0 0
    %142 = vmatprep.mubr.bf16.mxu0 0
    %143 = vmatmul.mubr.bf16.gmra.mrb[0].mxu0 %v108
    %v144 = vpop.f32.mrb[0].mxu0
    %v145 = vadd.f32 0.0, %v144
    %v146 = vpop.f32.mrb[0].mxu0
    %v147 = vpop.f32.mrb[0].mxu0
    %v148 = vpop.f32.mrb[0].mxu0
    %149 = vdwg.mxu0
    %v150 = vmax.f32 %v145, 0.0
    %v151 = vpack.c.bf16 %v150, %v150
    %v152 = vld [vmem:[#allocation7] sm:$0xf]
    %v153 = vld [vmem:[#allocation7 + $0x4] sm:$0xf]
    %v154 = vld [vmem:[#allocation7 + $0x8] sm:$0xf]
    %v155 = vld [vmem:[#allocation7 + $0xc] sm:$0xf]
    %v156 = vld [vmem:[#allocation7 + $0x10] sm:$0xf]
    %v157 = vld [vmem:[#allocation7 + $0x14] sm:$0xf]
    %v158 = vld [vmem:[#allocation7 + $0x18] sm:$0xf]
    %v159 = vld [vmem:[#allocation7 + $0x1c] sm:$0xf]
    %v160 = vld [vmem:[#allocation7 + $0x20] sm:$0xf]
    %v161 = vld [vmem:[#allocation7 + $0x24] sm:$0xf]
    %v162 = vld [vmem:[#allocation7 + $0x28] sm:$0xf]
    %v163 = vld [vmem:[#allocation7 + $0x2c] sm:$0xf]
    %v164 = vld [vmem:[#allocation7 + $0x30] sm:$0xf]
    %v165 = vld [vmem:[#allocation7 + $0x34] sm:$0xf]
    %v166 = vld [vmem:[#allocation7 + $0x38] sm:$0xf]
    %v167 = vld [vmem:[#allocation7 + $0x3c] sm:$0xf]
    %v184 = vunpack.c.l.b16 %v152
    %v185 = vunpack.c.l.b16 %v153
    %v186 = vunpack.c.l.b16 %v154
    %v187 = vunpack.c.l.b16 %v155
    %v188 = vunpack.c.l.b16 %v156
    %v189 = vunpack.c.l.b16 %v157
    %v190 = vunpack.c.l.b16 %v158
    %v191 = vunpack.c.l.b16 %v159
    %v192 = vunpack.c.l.b16 %v160
    %v193 = vunpack.c.l.b16 %v161
    %v194 = vunpack.c.l.b16 %v162
    %v195 = vunpack.c.l.b16 %v163
    %v196 = vunpack.c.l.b16 %v164
    %v197 = vunpack.c.l.b16 %v165
    %v198 = vunpack.c.l.b16 %v166
    %v199 = vunpack.c.l.b16 %v167
    %v200 = vpack.c.b16 %v185, %v184
    %v201 = vpack.c.b16 %v187, %v186
    %v202 = vpack.c.b16 %v189, %v188
    %v203 = vpack.c.b16 %v191, %v190
    %v204 = vpack.c.b16 %v193, %v192
    %v205 = vpack.c.b16 %v195, %v194
    %v206 = vpack.c.b16 %v197, %v196
    %v207 = vpack.c.b16 %v199, %v198
    %216 = vmatprep.subr.bf16.mxu0 0
    %217 = vmatpush1.bf16.msra.mxu0 %v200
    %218 = vmatprep.subr.bf16.mxu0 0
    %219 = vmatpush1.bf16.msra.mxu0 %v201
    %220 = vmatprep.subr.bf16.mxu0 0
    %221 = vmatpush1.bf16.msra.mxu0 %v202
    %222 = vmatprep.subr.bf16.mxu0 0
    %223 = vmatpush1.bf16.msra.mxu0 %v203
    %224 = vmatprep.subr.bf16.mxu0 0
    %225 = vmatpush1.bf16.msra.mxu0 %v204
    %226 = vmatprep.subr.bf16.mxu0 0
    %227 = vmatpush1.bf16.msra.mxu0 %v205
    %228 = vmatprep.subr.bf16.mxu0 0
    %229 = vmatpush1.bf16.msra.mxu0 %v206
    %230 = vmatprep.subr.bf16.mxu0 0
    %231 = vmatpush1.bf16.msra.mxu0 %v207
    %232 = vmatprep.subr.bf16.mxu0 0
    %233 = vmatpush1.bf16.msra.mxu0 0
    %234 = vmatprep.subr.bf16.mxu0 0
    %235 = vmatpush1.bf16.msra.mxu0 0
    %236 = vmatprep.subr.bf16.mxu0 0
    %237 = vmatpush1.bf16.msra.mxu0 0
    %238 = vmatprep.subr.bf16.mxu0 0
    %239 = vmatpush1.bf16.msra.mxu0 0
    %240 = vmatprep.subr.bf16.mxu0 0
    %241 = vmatpush1.bf16.msra.mxu0 0
    %242 = vmatprep.subr.bf16.mxu0 0
    %243 = vmatpush1.bf16.msra.mxu0 0
    %244 = vmatprep.subr.bf16.mxu0 0
    %245 = vmatpush1.bf16.msra.mxu0 0
    %246 = vmatprep.subr.bf16.mxu0 0
    %247 = vmatpush1.bf16.msra.mxu0 0
    %248 = vmatprep.mubr.bf16.mxu0 0
    %249 = vmatmul.mubr.bf16.gmra.mrb[0].mxu0 %v151
    %v250 = vpop.f32.mrb[0].mxu0
    %v251 = vadd.f32 0.0, %v250
    %v252 = vpop.f32.mrb[0].mxu0
    %v253 = vpop.f32.mrb[0].mxu0
    %v254 = vpop.f32.mrb[0].mxu0
    %255 = vdwg.mxu0
    %v256 = vmax.f32 %v251, 0.0
    %v257 = vpack.c.bf16 %v256, %v256
    %v258 = vld [vmem:[#allocation8] sm:$0xf]
    %v259 = vld [vmem:[#allocation8 + $0x4] sm:$0xf]
    %v260 = vld [vmem:[#allocation8 + $0x8] sm:$0xf]
    %v261 = vld [vmem:[#allocation8 + $0xc] sm:$0xf]
    %v262 = vld [vmem:[#allocation8 + $0x10] sm:$0xf]
    %v263 = vld [vmem:[#allocation8 + $0x14] sm:$0xf]
    %v264 = vld [vmem:[#allocation8 + $0x18] sm:$0xf]
    %v265 = vld [vmem:[#allocation8 + $0x1c] sm:$0xf]
    %v266 = vld [vmem:[#allocation8 + $0x20] sm:$0xf]
    %v267 = vld [vmem:[#allocation8 + $0x24] sm:$0xf]
    %v268 = vld [vmem:[#allocation8 + $0x28] sm:$0xf]
    %v269 = vld [vmem:[#allocation8 + $0x2c] sm:$0xf]
    %v270 = vld [vmem:[#allocation8 + $0x30] sm:$0xf]
    %v271 = vld [vmem:[#allocation8 + $0x34] sm:$0xf]
    %v272 = vld [vmem:[#allocation8 + $0x38] sm:$0xf]
    %v273 = vld [vmem:[#allocation8 + $0x3c] sm:$0xf]
    %v290 = vunpack.c.l.b16 %v258
    %v291 = vunpack.c.l.b16 %v259
    %v292 = vunpack.c.l.b16 %v260
    %v293 = vunpack.c.l.b16 %v261
    %v294 = vunpack.c.l.b16 %v262
    %v295 = vunpack.c.l.b16 %v263
    %v296 = vunpack.c.l.b16 %v264
    %v297 = vunpack.c.l.b16 %v265
    %v298 = vunpack.c.l.b16 %v266
    %v299 = vunpack.c.l.b16 %v267
    %v300 = vunpack.c.l.b16 %v268
    %v301 = vunpack.c.l.b16 %v269
    %v302 = vunpack.c.l.b16 %v270
    %v303 = vunpack.c.l.b16 %v271
    %v304 = vunpack.c.l.b16 %v272
    %v305 = vunpack.c.l.b16 %v273
    %v306 = vpack.c.b16 %v291, %v290
    %v307 = vpack.c.b16 %v293, %v292
    %v308 = vpack.c.b16 %v295, %v294
    %v309 = vpack.c.b16 %v297, %v296
    %v310 = vpack.c.b16 %v299, %v298
    %v311 = vpack.c.b16 %v301, %v300
    %v312 = vpack.c.b16 %v303, %v302
    %v313 = vpack.c.b16 %v305, %v304
    %322 = vmatprep.subr.bf16.mxu0 0
    %323 = vmatpush1.bf16.msra.mxu0 %v306
    %324 = vmatprep.subr.bf16.mxu0 0
    %325 = vmatpush1.bf16.msra.mxu0 %v307
    %326 = vmatprep.subr.bf16.mxu0 0
    %327 = vmatpush1.bf16.msra.mxu0 %v308
    %328 = vmatprep.subr.bf16.mxu0 0
    %329 = vmatpush1.bf16.msra.mxu0 %v309
    %330 = vmatprep.subr.bf16.mxu0 0
    %331 = vmatpush1.bf16.msra.mxu0 %v310
    %332 = vmatprep.subr.bf16.mxu0 0
    %333 = vmatpush1.bf16.msra.mxu0 %v311
    %334 = vmatprep.subr.bf16.mxu0 0
    %335 = vmatpush1.bf16.msra.mxu0 %v312
    %336 = vmatprep.subr.bf16.mxu0 0
    %337 = vmatpush1.bf16.msra.mxu0 %v313
    %338 = vmatprep.subr.bf16.mxu0 0
    %339 = vmatpush1.bf16.msra.mxu0 0
    %340 = vmatprep.subr.bf16.mxu0 0
    %341 = vmatpush1.bf16.msra.mxu0 0
    %342 = vmatprep.subr.bf16.mxu0 0
    %343 = vmatpush1.bf16.msra.mxu0 0
    %344 = vmatprep.subr.bf16.mxu0 0
    %345 = vmatpush1.bf16.msra.mxu0 0
    %346 = vmatprep.subr.bf16.mxu0 0
    %347 = vmatpush1.bf16.msra.mxu0 0
    %348 = vmatprep.subr.bf16.mxu0 0
    %349 = vmatpush1.bf16.msra.mxu0 0
    %350 = vmatprep.subr.bf16.mxu0 0
    %351 = vmatpush1.bf16.msra.mxu0 0
    %352 = vmatprep.subr.bf16.mxu0 0
    %353 = vmatpush1.bf16.msra.mxu0 0
    %354 = vmatprep.mubr.bf16.mxu0 0
    %355 = vmatmul.mubr.bf16.gmra.mrb[0].mxu0 %v257
    %v356 = vpop.f32.mrb[0].mxu0
    %v357 = vadd.f32 0.0, %v356
    %v358 = vpop.f32.mrb[0].mxu0
    %v359 = vpop.f32.mrb[0].mxu0
    %v360 = vpop.f32.mrb[0].mxu0
    %361 = vdwg.mxu0
    %362 = vst [vmem:[#allocation10] sm:$0x3] %v357
    // Predicated region
    $region34: #{tpu_custom_call.1} parent=1 // pred_check
      _
    $region35: #{tpu_custom_call.1} parent=1 // pred_check_branch
      %364 = sbr.rel (0) target = $region37
    $region36: #{tpu_custom_call.1} parent=1 // pred_region
      %s366 = ssub.s32 32, 32
      %367 = vsyncadd [#allocation4], %s366
      %s369 = sshll.u32 [#allocation10], 4
      %s370 = int_to_ptr.vmem [resolvable:$true] %s369
      %372 = dma.vmem_to_hbm [thread:$0]  %s370, 32, %s4, [#allocation4]
    $region37: #{tpu_custom_call.1} parent=1 // pred_fallthru
      _
    // Predicated region
    $region38: #{tpu_custom_call.1} parent=1 // pred_check
      _
    $region39: #{tpu_custom_call.1} parent=1 // pred_check_branch
      %374 = sbr.rel (0) target = $region41
    $region40: #{tpu_custom_call.1} parent=1 // pred_region
      %375 = dma.done [#allocation4], 32
    $region41: #{tpu_custom_call.1} parent=1 // pred_fallthru
      _
    %376 = vsyncpa [#allocation3], 1
    %377 = vsyncpa [#allocation6], 1
    %378 = vsyncpa [#allocation9], 1
    %379 = vsyncpa [#allocation4], 1

// kernel: tpu_custom_call.1
$region0: #{tpu_custom_call.1}
  #allocation0 [shape = 'u32[]', space=smem, size = 0x4, offset = 0x4, fixed_abs, tag = 'smem constant byte address 0x4 - core index']
  #allocation1 [shape = 'u32[144,128]{1,0:T(1,128)}', space=vmem, size = 0x12000, scoped, tag = 'internal scratch']
  %s0 = inlined_call_operand.hbm [shape: f32[2,64], index: 0, kind: input, shape index: {}]
  %s1 = inlined_call_operand.hbm [shape: bf16[64,128], index: 1, kind: input, shape index: {}]
  %s2 = inlined_call_operand.hbm [shape: bf16[128,128], index: 2, kind: input, shape index: {}]
  %s3 = inlined_call_operand.hbm [shape: bf16[128,128], index: 3, kind: input, shape index: {}]
  %s4 = inlined_call_operand.hbm [shape: f32[2,128], index: 4, kind: output, shape index: {}]
  %s5 = sld [smem:[#allocation0]]
  $region42: #{tpu_custom_call.1} parent=0
    _
  %s7 = ssub.s32 1, %s5
  %s8 = scalar_select 0, %s7, %s5
  $region1: #{tpu_custom_call.1} parent=0
    #allocation2 [shape = 'u8[1024]{0}', space=vmem, size = 0x400, scoped, tag = 'input window, operand 0, single buffered']
    #allocation3 [shape = 's32[1]{0}', space=sflag, size = 0x4, scoped, tag = 'scoped memory for tpu_custom_call.1']
    #allocation4 [shape = 's32[1]{0}', space=sflag, size = 0x4, scoped, tag = 'scoped memory for tpu_custom_call.1']
    #allocation5 [shape = 'u8[16384]{0}', space=vmem, size = 0x4000, scoped, tag = 'input window, operand 1, single buffered']
    #allocation6 [shape = 's32[1]{0}', space=sflag, size = 0x4, scoped, tag = 'scoped memory for tpu_custom_call.1']
    #allocation7 [shape = 'u8[32768]{0}', space=vmem, size = 0x8000, scoped, tag = 'input window, operand 2, single buffered']
    #allocation8 [shape = 'u8[32768]{0}', space=vmem, size = 0x8000, scoped, tag = 'input window, operand 3, single buffered']
    #allocation9 [shape = 's32[1]{0}', space=sflag, size = 0x4, scoped, tag = 'scoped memory for tpu_custom_call.1']
    #allocation10 [shape = 'u8[1024]{0}', space=vmem, size = 0x400, scoped, tag = 'output window, operand 0, single buffered']
    %9 = vsyncpa [#allocation3], 0
    %10 = vsyncpa [#allocation6], 0
    %11 = vsyncpa [#allocation9], 0
    %12 = vsyncpa [#allocation4], 0
    // Predicated region
    $region2: #{tpu_custom_call.1} parent=1 // pred_check
      _
    $region3: #{tpu_custom_call.1} parent=1 // pred_check_branch
      %14 = sbr.rel (0) target = $region5
    $region4: #{tpu_custom_call.1} parent=1 // pred_region
      %s16 = ssub.s32 32, 32
      %17 = vsyncadd [#allocation3], %s16
      %s19 = sshll.u32 [#allocation2], 4
      %s20 = int_to_ptr.vmem [resolvable:$true] %s19
      %22 = dma.hbm_to_vmem [thread:$0]  %s0, 32, %s20, [#allocation3]
    $region5: #{tpu_custom_call.1} parent=1 // pred_fallthru
      _
    // Predicated region
    $region6: #{tpu_custom_call.1} parent=1 // pred_check
      _
    $region7: #{tpu_custom_call.1} parent=1 // pred_check_branch
      %24 = sbr.rel (0) target = $region9
    $region8: #{tpu_custom_call.1} parent=1 // pred_region
      %s26 = ssub.s32 512, 512
      %27 = vsyncadd [#allocation6], %s26
      %s28 = sshll.u32 [#allocation5], 4
      %s29 = int_to_ptr.vmem [resolvable:$true] %s28
      %34 = dma.hbm_to_vmem [thread:$0]  %s1, 512, %s29, [#allocation6], 64, 64, 4
    $region9: #{tpu_custom_call.1} parent=1 // pred_fallthru
      _
    // Predicated region
    $region10: #{tpu_custom_call.1} parent=1 // pred_check
      _
    $region11: #{tpu_custom_call.1} parent=1 // pred_check_branch
      %36 = sbr.rel (0) target = $region13
    $region12: #{tpu_custom_call.1} parent=1 // pred_region
      %s38 = ssub.s32 1024, 1024
      %39 = vsyncadd [#allocation6], %s38
      %s40 = sshll.u32 [#allocation7], 4
      %s41 = int_to_ptr.vmem [resolvable:$true] %s40
      %46 = dma.hbm_to_vmem [thread:$0]  %s2, 1024, %s41, [#allocation6], 64, 64, 4
    $region13: #{tpu_custom_call.1} parent=1 // pred_fallthru
      _
    // Predicated region
    $region14: #{tpu_custom_call.1} parent=1 // pred_check
      _
    $region15: #{tpu_custom_call.1} parent=1 // pred_check_branch
      %48 = sbr.rel (0) target = $region17
    $region16: #{tpu_custom_call.1} parent=1 // pred_region
      %s50 = ssub.s32 1024, 1024
      %51 = vsyncadd [#allocation9], %s50
      %s52 = sshll.u32 [#allocation8], 4
      %s53 = int_to_ptr.vmem [resolvable:$true] %s52
      %58 = dma.hbm_to_vmem [thread:$0]  %s3, 1024, %s53, [#allocation9], 64, 64, 4
    $region17: #{tpu_custom_call.1} parent=1 // pred_fallthru
      _
    // Predicated region
    $region18: #{tpu_custom_call.1} parent=1 // pred_check
      _
    $region19: #{tpu_custom_call.1} parent=1 // pred_check_branch
      %60 = sbr.rel (0) target = $region21
    $region20: #{tpu_custom_call.1} parent=1 // pred_region
      %61 = dma.done [#allocation3], 32
    $region21: #{tpu_custom_call.1} parent=1 // pred_fallthru
      _
    // Predicated region
    $region22: #{tpu_custom_call.1} parent=1 // pred_check
      _
    $region23: #{tpu_custom_call.1} parent=1 // pred_check_branch
      %63 = sbr.rel (0) target = $region25
    $region24: #{tpu_custom_call.1} parent=1 // pred_region
      %64 = dma.done [#allocation6], 512
    $region25: #{tpu_custom_call.1} parent=1 // pred_fallthru
      _
    // Predicated region
    $region26: #{tpu_custom_call.1} parent=1 // pred_check
      _
    $region27: #{tpu_custom_call.1} parent=1 // pred_check_branch
      %66 = sbr.rel (0) target = $region29
    $region28: #{tpu_custom_call.1} parent=1 // pred_region
      %67 = dma.done [#allocation6], 1024
    $region29: #{tpu_custom_call.1} parent=1 // pred_fallthru
      _
    // Predicated region
    $region30: #{tpu_custom_call.1} parent=1 // pred_check
      _
    $region31: #{tpu_custom_call.1} parent=1 // pred_check_branch
      %69 = sbr.rel (0) target = $region33
    $region32: #{tpu_custom_call.1} parent=1 // pred_region
      %70 = dma.done [#allocation9], 1024
    $region33: #{tpu_custom_call.1} parent=1 // pred_fallthru
      _
    %v72 = vld [vmem:[#allocation2] sm:$0x3]
    %v73 = vpack.c.bf16 %v72, %v72
    %v74 = vld [vmem:[#allocation5] sm:$0xf]
    %v75 = vld [vmem:[#allocation5 + $0x4] sm:$0xf]
    %v76 = vld [vmem:[#allocation5 + $0x8] sm:$0xf]
    %v77 = vld [vmem:[#allocation5 + $0xc] sm:$0xf]
    %v78 = vld [vmem:[#allocation5 + $0x10] sm:$0xf]
    %v79 = vld [vmem:[#allocation5 + $0x14] sm:$0xf]
    %v80 = vld [vmem:[#allocation5 + $0x18] sm:$0xf]
    %v81 = vld [vmem:[#allocation5 + $0x1c] sm:$0xf]
    %v90 = vunpack.c.l.b16 %v74
    %v91 = vunpack.c.l.b16 %v75
    %v92 = vunpack.c.l.b16 %v76
    %v93 = vunpack.c.l.b16 %v77
    %v94 = vunpack.c.l.b16 %v78
    %v95 = vunpack.c.l.b16 %v79
    %v96 = vunpack.c.l.b16 %v80
    %v97 = vunpack.c.l.b16 %v81
    %v98 = vpack.c.b16 %v91, %v90
    %v99 = vpack.c.b16 %v93, %v92
    %v100 = vpack.c.b16 %v95, %v94
    %v101 = vpack.c.b16 %v97, %v96
    %vm106 = vcmask 523264
    %v108 = vsel %vm106, %v73, 0
    %110 = vmatprep.subr.bf16.mxu0 0
    %111 = vmatpush1.bf16.msra.mxu0 %v98
    %112 = vmatprep.subr.bf16.mxu0 0
    %113 = vmatpush1.bf16.msra.mxu0 %v99
    %114 = vmatprep.subr.bf16.mxu0 0
    %115 = vmatpush1.bf16.msra.mxu0 %v100
    %116 = vmatprep.subr.bf16.mxu0 0
    %117 = vmatpush1.bf16.msra.mxu0 %v101
    %118 = vmatprep.subr.bf16.mxu0 0
    %119 = vmatpush1.bf16.msra.mxu0 0
    %120 = vmatprep.subr.bf16.mxu0 0
    %121 = vmatpush1.bf16.msra.mxu0 0
    %122 = vmatprep.subr.bf16.mxu0 0
    %123 = vmatpush1.bf16.msra.mxu0 0
    %124 = vmatprep.subr.bf16.mxu0 0
    %125 = vmatpush1.bf16.msra.mxu0 0
    %126 = vmatprep.subr.bf16.mxu0 0
    %127 = vmatpush1.bf16.msra.mxu0 0
    %128 = vmatprep.subr.bf16.mxu0 0
    %129 = vmatpush1.bf16.msra.mxu0 0
    %130 = vmatprep.subr.bf16.mxu0 0
    %131 = vmatpush1.bf16.msra.mxu0 0
    %132 = vmatprep.subr.bf16.mxu0 0
    %133 = vmatpush1.bf16.msra.mxu0 0
    %134 = vmatprep.subr.bf16.mxu0 0
    %135 = vmatpush1.bf16.msra.mxu0 0
    %136 = vmatprep.subr.bf16.mxu0 0
    %137 = vmatpush1.bf16.msra.mxu0 0
    %138 = vmatprep.subr.bf16.mxu0 0
    %139 = vmatpush1.bf16.msra.mxu0 0
    %140 = vmatprep.subr.bf16.mxu0 0
    %141 = vmatpush1.bf16.msra.mxu0 0
    %142 = vmatprep.mubr.bf16.mxu0 0
    %143 = vmatmul.mubr.bf16.gmra.mrb[0].mxu0 %v108
    %v144 = vpop.f32.mrb[0].mxu0
    %v145 = vadd.f32 0.0, %v144
    %v146 = vpop.f32.mrb[0].mxu0
    %v147 = vpop.f32.mrb[0].mxu0
    %v148 = vpop.f32.mrb[0].mxu0
    %149 = vdwg.mxu0
    %v150 = vmax.f32 %v145, 0.0
    %v151 = vpack.c.bf16 %v150, %v150
    %v152 = vld [vmem:[#allocation7] sm:$0xf]
    %v153 = vld [vmem:[#allocation7 + $0x4] sm:$0xf]
    %v154 = vld [vmem:[#allocation7 + $0x8] sm:$0xf]
    %v155 = vld [vmem:[#allocation7 + $0xc] sm:$0xf]
    %v156 = vld [vmem:[#allocation7 + $0x10] sm:$0xf]
    %v157 = vld [vmem:[#allocation7 + $0x14] sm:$0xf]
    %v158 = vld [vmem:[#allocation7 + $0x18] sm:$0xf]
    %v159 = vld [vmem:[#allocation7 + $0x1c] sm:$0xf]
    %v160 = vld [vmem:[#allocation7 + $0x20] sm:$0xf]
    %v161 = vld [vmem:[#allocation7 + $0x24] sm:$0xf]
    %v162 = vld [vmem:[#allocation7 + $0x28] sm:$0xf]
    %v163 = vld [vmem:[#allocation7 + $0x2c] sm:$0xf]
    %v164 = vld [vmem:[#allocation7 + $0x30] sm:$0xf]
    %v165 = vld [vmem:[#allocation7 + $0x34] sm:$0xf]
    %v166 = vld [vmem:[#allocation7 + $0x38] sm:$0xf]
    %v167 = vld [vmem:[#allocation7 + $0x3c] sm:$0xf]
    %v184 = vunpack.c.l.b16 %v152
    %v185 = vunpack.c.l.b16 %v153
    %v186 = vunpack.c.l.b16 %v154
    %v187 = vunpack.c.l.b16 %v155
    %v188 = vunpack.c.l.b16 %v156
    %v189 = vunpack.c.l.b16 %v157
    %v190 = vunpack.c.l.b16 %v158
    %v191 = vunpack.c.l.b16 %v159
    %v192 = vunpack.c.l.b16 %v160
    %v193 = vunpack.c.l.b16 %v161
    %v194 = vunpack.c.l.b16 %v162
    %v195 = vunpack.c.l.b16 %v163
    %v196 = vunpack.c.l.b16 %v164
    %v197 = vunpack.c.l.b16 %v165
    %v198 = vunpack.c.l.b16 %v166
    %v199 = vunpack.c.l.b16 %v167
    %v200 = vpack.c.b16 %v185, %v184
    %v201 = vpack.c.b16 %v187, %v186
    %v202 = vpack.c.b16 %v189, %v188
    %v203 = vpack.c.b16 %v191, %v190
    %v204 = vpack.c.b16 %v193, %v192
    %v205 = vpack.c.b16 %v195, %v194
    %v206 = vpack.c.b16 %v197, %v196
    %v207 = vpack.c.b16 %v199, %v198
    %216 = vmatprep.subr.bf16.mxu0 0
    %217 = vmatpush1.bf16.msra.mxu0 %v200
    %218 = vmatprep.subr.bf16.mxu0 0
    %219 = vmatpush1.bf16.msra.mxu0 %v201
    %220 = vmatprep.subr.bf16.mxu0 0
    %221 = vmatpush1.bf16.msra.mxu0 %v202
    %222 = vmatprep.subr.bf16.mxu0 0
    %223 = vmatpush1.bf16.msra.mxu0 %v203
    %224 = vmatprep.subr.bf16.mxu0 0
    %225 = vmatpush1.bf16.msra.mxu0 %v204
    %226 = vmatprep.subr.bf16.mxu0 0
    %227 = vmatpush1.bf16.msra.mxu0 %v205
    %228 = vmatprep.subr.bf16.mxu0 0
    %229 = vmatpush1.bf16.msra.mxu0 %v206
    %230 = vmatprep.subr.bf16.mxu0 0
    %231 = vmatpush1.bf16.msra.mxu0 %v207
    %232 = vmatprep.subr.bf16.mxu0 0
    %233 = vmatpush1.bf16.msra.mxu0 0
    %234 = vmatprep.subr.bf16.mxu0 0
    %235 = vmatpush1.bf16.msra.mxu0 0
    %236 = vmatprep.subr.bf16.mxu0 0
    %237 = vmatpush1.bf16.msra.mxu0 0
    %238 = vmatprep.subr.bf16.mxu0 0
    %239 = vmatpush1.bf16.msra.mxu0 0
    %240 = vmatprep.subr.bf16.mxu0 0
    %241 = vmatpush1.bf16.msra.mxu0 0
    %242 = vmatprep.subr.bf16.mxu0 0
    %243 = vmatpush1.bf16.msra.mxu0 0
    %244 = vmatprep.subr.bf16.mxu0 0
    %245 = vmatpush1.bf16.msra.mxu0 0
    %246 = vmatprep.subr.bf16.mxu0 0
    %247 = vmatpush1.bf16.msra.mxu0 0
    %248 = vmatprep.mubr.bf16.mxu0 0
    %249 = vmatmul.mubr.bf16.gmra.mrb[0].mxu0 %v151
    %v250 = vpop.f32.mrb[0].mxu0
    %v251 = vadd.f32 0.0, %v250
    %v252 = vpop.f32.mrb[0].mxu0
    %v253 = vpop.f32.mrb[0].mxu0
    %v254 = vpop.f32.mrb[0].mxu0
    %255 = vdwg.mxu0
    %v256 = vmax.f32 %v251, 0.0
    %v257 = vpack.c.bf16 %v256, %v256
    %v258 = vld [vmem:[#allocation8] sm:$0xf]
    %v259 = vld [vmem:[#allocation8 + $0x4] sm:$0xf]
    %v260 = vld [vmem:[#allocation8 + $0x8] sm:$0xf]
    %v261 = vld [vmem:[#allocation8 + $0xc] sm:$0xf]
    %v262 = vld [vmem:[#allocation8 + $0x10] sm:$0xf]
    %v263 = vld [vmem:[#allocation8 + $0x14] sm:$0xf]
    %v264 = vld [vmem:[#allocation8 + $0x18] sm:$0xf]
    %v265 = vld [vmem:[#allocation8 + $0x1c] sm:$0xf]
    %v266 = vld [vmem:[#allocation8 + $0x20] sm:$0xf]
    %v267 = vld [vmem:[#allocation8 + $0x24] sm:$0xf]
    %v268 = vld [vmem:[#allocation8 + $0x28] sm:$0xf]
    %v269 = vld [vmem:[#allocation8 + $0x2c] sm:$0xf]
    %v270 = vld [vmem:[#allocation8 + $0x30] sm:$0xf]
    %v271 = vld [vmem:[#allocation8 + $0x34] sm:$0xf]
    %v272 = vld [vmem:[#allocation8 + $0x38] sm:$0xf]
    %v273 = vld [vmem:[#allocation8 + $0x3c] sm:$0xf]
    %v290 = vunpack.c.l.b16 %v258
    %v291 = vunpack.c.l.b16 %v259
    %v292 = vunpack.c.l.b16 %v260
    %v293 = vunpack.c.l.b16 %v261
    %v294 = vunpack.c.l.b16 %v262
    %v295 = vunpack.c.l.b16 %v263
    %v296 = vunpack.c.l.b16 %v264
    %v297 = vunpack.c.l.b16 %v265
    %v298 = vunpack.c.l.b16 %v266
    %v299 = vunpack.c.l.b16 %v267
    %v300 = vunpack.c.l.b16 %v268
    %v301 = vunpack.c.l.b16 %v269
    %v302 = vunpack.c.l.b16 %v270
    %v303 = vunpack.c.l.b16 %v271
    %v304 = vunpack.c.l.b16 %v272
    %v305 = vunpack.c.l.b16 %v273
    %v306 = vpack.c.b16 %v291, %v290
    %v307 = vpack.c.b16 %v293, %v292
    %v308 = vpack.c.b16 %v295, %v294
    %v309 = vpack.c.b16 %v297, %v296
    %v310 = vpack.c.b16 %v299, %v298
    %v311 = vpack.c.b16 %v301, %v300
    %v312 = vpack.c.b16 %v303, %v302
    %v313 = vpack.c.b16 %v305, %v304
    %322 = vmatprep.subr.bf16.mxu0 0
    %323 = vmatpush1.bf16.msra.mxu0 %v306
    %324 = vmatprep.subr.bf16.mxu0 0
    %325 = vmatpush1.bf16.msra.mxu0 %v307
    %326 = vmatprep.subr.bf16.mxu0 0
    %327 = vmatpush1.bf16.msra.mxu0 %v308
    %328 = vmatprep.subr.bf16.mxu0 0
    %329 = vmatpush1.bf16.msra.mxu0 %v309
    %330 = vmatprep.subr.bf16.mxu0 0
    %331 = vmatpush1.bf16.msra.mxu0 %v310
    %332 = vmatprep.subr.bf16.mxu0 0
    %333 = vmatpush1.bf16.msra.mxu0 %v311
    %334 = vmatprep.subr.bf16.mxu0 0
    %335 = vmatpush1.bf16.msra.mxu0 %v312
    %336 = vmatprep.subr.bf16.mxu0 0
    %337 = vmatpush1.bf16.msra.mxu0 %v313
    %338 = vmatprep.subr.bf16.mxu0 0
    %339 = vmatpush1.bf16.msra.mxu0 0
    %340 = vmatprep.subr.bf16.mxu0 0
    %341 = vmatpush1.bf16.msra.mxu0 0
    %342 = vmatprep.subr.bf16.mxu0 0
    %343 = vmatpush1.bf16.msra.mxu0 0
    %344 = vmatprep.subr.bf16.mxu0 0
    %345 = vmatpush1.bf16.msra.mxu0 0
    %346 = vmatprep.subr.bf16.mxu0 0
    %347 = vmatpush1.bf16.msra.mxu0 0
    %348 = vmatprep.subr.bf16.mxu0 0
    %349 = vmatpush1.bf16.msra.mxu0 0
    %350 = vmatprep.subr.bf16.mxu0 0
    %351 = vmatpush1.bf16.msra.mxu0 0
    %352 = vmatprep.subr.bf16.mxu0 0
    %353 = vmatpush1.bf16.msra.mxu0 0
    %354 = vmatprep.mubr.bf16.mxu0 0
    %355 = vmatmul.mubr.bf16.gmra.mrb[0].mxu0 %v257
    %v356 = vpop.f32.mrb[0].mxu0
    %v357 = vadd.f32 0.0, %v356
    %v358 = vpop.f32.mrb[0].mxu0
    %v359 = vpop.f32.mrb[0].mxu0
    %v360 = vpop.f32.mrb[0].mxu0
    %361 = vdwg.mxu0
    %362 = vst [vmem:[#allocation10] sm:$0x3] %v357
    // Predicated region
    $region34: #{tpu_custom_call.1} parent=1 // pred_check
      _
    $region35: #{tpu_custom_call.1} parent=1 // pred_check_branch
      %364 = sbr.rel (0) target = $region37
    $region36: #{tpu_custom_call.1} parent=1 // pred_region
      %s366 = ssub.s32 32, 32
      %367 = vsyncadd [#allocation4], %s366
      %s369 = sshll.u32 [#allocation10], 4
      %s370 = int_to_ptr.vmem [resolvable:$true] %s369
      %372 = dma.vmem_to_hbm [thread:$0]  %s370, 32, %s4, [#allocation4]
    $region37: #{tpu_custom_call.1} parent=1 // pred_fallthru
      _
    // Predicated region
    $region38: #{tpu_custom_call.1} parent=1 // pred_check
      _
    $region39: #{tpu_custom_call.1} parent=1 // pred_check_branch
      %374 = sbr.rel (0) target = $region41
    $region40: #{tpu_custom_call.1} parent=1 // pred_region
      %375 = dma.done [#allocation4], 32
    $region41: #{tpu_custom_call.1} parent=1 // pred_fallthru
      _
    %376 = vsyncpa [#allocation3], 1
    %377 = vsyncpa [#allocation6], 1
    %378 = vsyncpa [#allocation9], 1
    %379 = vsyncpa [#allocation4], 1

</llo_original>
